<compile_context>
chip_gen: v7x
topology: tpu7x:2x2x1
jax: 0.10.0
libtpu: 0.0.40
codegen_flags: <defaults>
</compile_context>

<pallas_src>
import jax
import jax.numpy as jnp
from jax.experimental import pallas as pl
from jax.experimental.pallas import tpu as pltpu


def _round_up(x, m):
    return (x + m - 1) // m * m


def _largest_divisor_tile(total, quantum, target):
    """Largest multiple of `quantum` that divides `total` and is <= target.
    `total` must itself be a multiple of `quantum`."""
    q = total // quantum
    best = 1
    for d in range(1, q + 1):
        if q % d == 0 and quantum * d <= target:
            best = d
    return quantum * best


def _pick_tile_p(p_pad8, target):
    tile = _largest_divisor_tile(p_pad8, 8, target)
    # Degenerate divisor (e.g. prime factor): accept padding to keep tiles fat.
    return tile if tile * 2 >= min(target, p_pad8) else target


def _pick_tile_k(k_pad128, target):
    tile = _largest_divisor_tile(k_pad128, 128, target)
    if tile >= 512 or k_pad128 <= tile:
        return tile
    if k_pad128 <= 4096:      # take the whole reduction in a single fat step
        return k_pad128
    return target             # accept a zero-padded tail K tile


def _tile_defaults():
    """Per-generation (max_tile_p, vmem_limit_bytes).

    v6e (128 MiB VMEM, HBM-bound): big spatial tiles cut 3x3-weight re-reads.
    v5e (MXU-bound, 16 MiB default scoped VMEM): explicit limit is the key.
    Fallback (covers v7x's 64 MiB-per-TC VMEM): 1024 / 48 MiB keeps the
    double-buffered working set at ~30 MiB for Cout=1280."""
    try:
        kind = jax.devices()[0].device_kind.lower()
    except Exception:
        kind = ""
    if "v6" in kind:
        return 2048, 96 * 1024 * 1024
    if "v5 lite" in kind or "v5e" in kind:
        return 1024, 64 * 1024 * 1024
    return 1024, 48 * 1024 * 1024


def conv3x3_silu_zeroconv(x, w, b, wz, bz, stride, *, emit_feature=True,
                          z_dtype=jnp.bfloat16, max_tile_p=None,
                          max_tile_k=1280, vmem_limit_bytes=None):
    """One encoder layer.

    x : [B,H,W,Cin] NHWC (f32 or bf16)
    w : [Cout,Cin,3,3] (torch layout), b: [Cout]
    wz: [Cout,Cout,1,1],               bz: [Cout]
    Returns (feature bf16 or None, zero-conv feature `z_dtype`), NHWC.
    """
    B, H, W, Cin = x.shape
    Cout = w.shape[0]
    Ho = (H + 2 - 3) // stride + 1
    Wo = (W + 2 - 3) // stride + 1
    P, K = Ho * Wo, 9 * Cin

    dflt_p, dflt_v = _tile_defaults()
    max_tile_p = max_tile_p or dflt_p
    vmem_limit_bytes = vmem_limit_bytes or dflt_v

    cout_p = _round_up(Cout, 128)
    tile_k = _pick_tile_k(_round_up(K, 128), max_tile_k)
    k_pad = _round_up(K, tile_k)
    tile_p = _pick_tile_p(_round_up(P, 8), max_tile_p)
    p_pad = _round_up(P, tile_p)

    # --- glue: im2col patch extraction (bf16; K-pad folded into the concat) ---
    # TODO(synk): fuse the 3x3 patch extraction into the kernel via halo'd
    # spatial-tile DMAs (memory_space=pl.ANY) to remove this HBM round trip.
    xp = jnp.pad(x.astype(jnp.bfloat16), ((0, 0), (1, 1), (1, 1), (0, 0)))
    cols = []
    for kh in range(3):
        for kw in range(3):
            cols.append(xp[:, kh:kh + (Ho - 1) * stride + 1:stride,
                            kw:kw + (Wo - 1) * stride + 1:stride, :])
    if k_pad > K:
        cols.append(jnp.zeros((B, Ho, Wo, k_pad - K), jnp.bfloat16))
    patches = jnp.concatenate(cols, axis=-1).reshape(B, P, k_pad)
    if p_pad > P:
        # Padded P rows compute SiLU(bias) on garbage and are sliced off below.
        patches = jnp.pad(patches, ((0, 0), (0, p_pad - P), (0, 0)))

    # --- glue: parameter layout for the GEMM (bf16 MXU operands, padded) ---
    w_mat = jnp.transpose(w, (2, 3, 1, 0)).reshape(K, Cout)             # (K, Cout)
    w_mat = jnp.pad(w_mat, ((0, k_pad - K), (0, cout_p - Cout)))
    w_mat = w_mat.astype(jnp.bfloat16)
    wz_mat = jnp.transpose(wz[:, :, 0, 0], (1, 0))                      # (Cin=Cout, Cout)
    wz_mat = jnp.pad(wz_mat, ((0, cout_p - Cout), (0, cout_p - Cout)))
    wz_mat = wz_mat.astype(jnp.bfloat16)
    b2 = jnp.pad(b, (0, cout_p - Cout)).reshape(1, cout_p).astype(jnp.float32)
    bz2 = jnp.pad(bz, (0, cout_p - Cout)).reshape(1, cout_p).astype(jnp.float32)

    def kernel(p_ref, w_ref, b_ref, wz_ref, bz_ref, *rest):
        if emit_feature:
            f_ref, z_ref, acc_ref = rest
        else:
            z_ref, acc_ref = rest
        k = pl.program_id(2)

        @pl.when(k == 0)
        def _():
            acc_ref[...] = jnp.zeros_like(acc_ref)

        acc_ref[...] += jnp.dot(p_ref[0], w_ref[...],
                                preferred_element_type=jnp.float32)

        @pl.when(k == pl.num_programs(2) - 1)
        def _():
            acc = acc_ref[...] + b_ref[...]
            feat = acc * jax.nn.sigmoid(acc)              # SiLU in f32 (VPU+EUP)
            feat_bf = feat.astype(jnp.bfloat16)
            if emit_feature:
                f_ref[0] = feat_bf
            z = jnp.dot(feat_bf, wz_ref[...],
                        preferred_element_type=jnp.float32) + bz_ref[...]
            z_ref[0] = z.astype(z_ref.dtype)

    const = pl.Buffered(1)   # fetch-once operands: single VMEM copy
    in_specs = [
        pl.BlockSpec((1, tile_p, tile_k), lambda i, j, k: (i, j, k)),
        pl.BlockSpec((tile_k, cout_p), lambda i, j, k: (k, 0)),
        pl.BlockSpec((1, cout_p), lambda i, j, k: (0, 0), pipeline_mode=const),
        pl.BlockSpec((cout_p, cout_p), lambda i, j, k: (0, 0), pipeline_mode=const),
        pl.BlockSpec((1, cout_p), lambda i, j, k: (0, 0), pipeline_mode=const),
    ]
    out_shapes = []
    out_specs = []
    if emit_feature:
        out_shapes.append(jax.ShapeDtypeStruct((B, p_pad, cout_p), jnp.bfloat16))
        out_specs.append(pl.BlockSpec((1, tile_p, cout_p), lambda i, j, k: (i, j, 0)))
    out_shapes.append(jax.ShapeDtypeStruct((B, p_pad, cout_p), z_dtype))
    out_specs.append(pl.BlockSpec((1, tile_p, cout_p), lambda i, j, k: (i, j, 0)))

    results = pl.pallas_call(
        kernel,
        out_shape=tuple(out_shapes),
        grid_spec=pltpu.PrefetchScalarGridSpec(
            num_scalar_prefetch=0,
            grid=(B, p_pad // tile_p, k_pad // tile_k),
            in_specs=in_specs,
            out_specs=out_specs,
            scratch_shapes=[pltpu.VMEM((tile_p, cout_p), jnp.float32)],
        ),
        compiler_params=pltpu.CompilerParams(
            dimension_semantics=("parallel", "parallel", "arbitrary"),
            vmem_limit_bytes=vmem_limit_bytes,
        ),
    )(patches, w_mat, b2, wz_mat, bz2)

    if not isinstance(results, (tuple, list)):
        results = (results,)
    if emit_feature:
        feat_p, z_p = results
        feat = feat_p[:, :P, :Cout].reshape(B, Ho, Wo, Cout)
    else:
        (z_p,) = results
        feat = None
    zfeat = z_p[:, :P, :Cout].reshape(B, Ho, Wo, Cout)
    return feat, zfeat


def init_params(key, c_in, channels, zero_init_zeroconv=True):
    """Deterministic synthetic params matching the torch module's shapes."""
    params = []
    for ch in channels:
        key, k1, k2, k3, k4 = jax.random.split(key, 5)
        w = jax.random.normal(k1, (ch, c_in, 3, 3), jnp.float32) * 0.05
        b = jax.random.normal(k2, (ch,), jnp.float32) * 0.01
        if zero_init_zeroconv:
            # zero_module(nn.Conv2d(ch, ch, 1)): weights and bias all zeros.
            wz = jnp.zeros((ch, ch, 1, 1), jnp.float32)
            bz = jnp.zeros((ch,), jnp.float32)
        else:
            wz = jax.random.normal(k3, (ch, ch, 1, 1), jnp.float32) * 0.05
            bz = jax.random.normal(k4, (ch,), jnp.float32) * 0.01
        params.append((w, b, wz, bz))
        c_in = ch
    return params


def flow_controlnet_first_frame_encoder(first_frame, params, downsamples):
    """first_frame: [B,H,W,Cin] NHWC.  Returns list of deep features (NHWC)."""
    # TODO(synk): fuse the spatially-small late layers into one pallas_call that
    # keeps the intermediate bf16 feature resident in VMEM across layers.
    feature = first_frame
    deep_features = []
    n = len(params)
    for li, ((w, b, wz, bz), ds) in enumerate(zip(params, downsamples)):
        feature, z = conv3x3_silu_zeroconv(
            feature, w, b, wz, bz, stride=2 if ds else 1,
            emit_feature=(li != n - 1))   # last layer's SiLU feature is unused
        deep_features.append(z)
    return deep_features


# ----------------------------- references ----------------------------------

def _reference_conv_silu(x, w, b, stride):
    """Pure-JAX f32 reference (NHWC) for one conv+SiLU."""
    w_hwio = jnp.transpose(w, (2, 3, 1, 0))
    y = jax.lax.conv_general_dilated(
        x.astype(jnp.float32), w_hwio, window_strides=(stride, stride),
        padding=((1, 1), (1, 1)),
        dimension_numbers=("NHWC", "HWIO", "NHWC"))
    y = y + b.reshape(1, 1, 1, -1)
    return y * jax.nn.sigmoid(y)


def _reference_zeroconv(feat, wz, bz):
    return jnp.einsum("bhwc,oc->bhwo", feat, wz[:, :, 0, 0]) + bz.reshape(1, 1, 1, -1)


def _reference_encoder(x, params, downsamples):
    feat = x.astype(jnp.float32)
    feats, zs = [], []
    for (w, b, wz, bz), ds in zip(params, downsamples):
        feat = _reference_conv_silu(feat, w, b, 2 if ds else 1)
        feats.append(feat)
        zs.append(_reference_zeroconv(feat, wz, bz))
    return feats, zs


if __name__ == "__main__":
    # Small shapes consistent with the module (scaled down from 320/[320,640,1280]).
    B, H, W, C_IN = 2, 16, 16, 4
    CHANNELS = (8, 16, 32)
    DOWNSAMPLES = (True, True, True)

    key = jax.random.PRNGKey(0)
    key, kx = jax.random.split(key)
    x = jax.random.normal(kx, (B, H, W, C_IN), jnp.float32)  # NHWC

    params = init_params(key, C_IN, CHANNELS)

    # --- full forward (zero-initialized zero-convs, as in the torch module) ---
    deep_features = flow_controlnet_first_frame_encoder(x, params, DOWNSAMPLES)
    deep_features = [jax.block_until_ready(d) for d in deep_features]

    exp_hw = H
    for d, ch, ds in zip(deep_features, CHANNELS, DOWNSAMPLES):
        exp_hw = (exp_hw + 2 - 3) // (2 if ds else 1) + 1
        assert d.shape == (B, exp_hw, exp_hw, ch), d.shape
    # zero_module => deep features must be exactly zero.
    assert all(bool(jnp.all(d.astype(jnp.float32) == 0.0)) for d in deep_features)

    # --- single-layer conv+SiLU vs f32 reference (stride 2 and 1) ---
    w0, b0, wz0, bz0 = params[0]
    for stride in (2, 1):
        feat, _ = conv3x3_silu_zeroconv(x, w0, b0, wz0, bz0, stride=stride)
        ref = _reference_conv_silu(x, w0, b0, stride)
        err = float(jnp.max(jnp.abs(feat.astype(jnp.float32) - ref)))
        assert jnp.allclose(feat.astype(jnp.float32), ref,
                            atol=2e-2, rtol=2e-2), (stride, err)

    # --- multi-layer chained feature vs f32 reference (compounded bf16 error) ---
    ref_feats, _ = _reference_encoder(x, params, DOWNSAMPLES)
    feat = x
    for (w, b, wz, bz), ds in zip(params, DOWNSAMPLES):
        feat, _ = conv3x3_silu_zeroconv(feat, w, b, wz, bz, stride=2 if ds else 1)
    errc = float(jnp.max(jnp.abs(feat.astype(jnp.float32) - ref_feats[-1])))
    assert jnp.allclose(feat.astype(jnp.float32), ref_feats[-1],
                        atol=3e-2, rtol=3e-2), errc

    # --- non-zero zero-conv path (validates the fused 1x1 GEMM epilogue) ---
    params_nz = init_params(jax.random.PRNGKey(1), C_IN, CHANNELS,
                            zero_init_zeroconv=False)
    wn, bn, wzn, bzn = params_nz[0]
    _, z0 = conv3x3_silu_zeroconv(x, wn, bn, wzn, bzn, stride=2)
    ref_z0 = _reference_zeroconv(_reference_conv_silu(x, wn, bn, 2), wzn, bzn)
    errz = float(jnp.max(jnp.abs(z0.astype(jnp.float32) - ref_z0)))
    assert jnp.allclose(z0.astype(jnp.float32), ref_z0,
                        atol=2e-2, rtol=2e-2), errz

    print("KERNEL_OK")
</pallas_src>

<mosaic_0001>
module attributes {stable_mosaic.version = 11 : i64} {
  func.func @kernel(%arg0: i32, %arg1: i32, %arg2: i32, %arg3: memref<1x64x128xbf16, #tpu.memory_space<vmem>>, %arg4: memref<128x128xbf16, #tpu.memory_space<vmem>>, %arg5: memref<1x128xf32, #tpu.memory_space<vmem>>, %arg6: memref<128x128xbf16, #tpu.memory_space<vmem>>, %arg7: memref<1x128xf32, #tpu.memory_space<vmem>>, %arg8: memref<1x64x128xbf16, #tpu.memory_space<vmem>>, %arg9: memref<1x64x128xbf16, #tpu.memory_space<vmem>>, %arg10: memref<64x128xf32, #tpu.memory_space<vmem>>) attributes {dimension_semantics = [#tpu.dimension_semantics<parallel>, #tpu.dimension_semantics<parallel>, #tpu.dimension_semantics<arbitrary>], iteration_bounds = array<i64: 2, 1, 1>, scalar_prefetch = 0 : i64, scratch_operands = 1 : i64, tpu.core_type = #tpu.core_type<tc>, window_params = [{transform_indices = @transform_0, window_bounds = array<i64: 1, 64, 128>}, {transform_indices = @transform_1, window_bounds = array<i64: 128, 128>}, {pipeline_mode = #tpu.pipeline_mode<synchronous>, transform_indices = @transform_2, window_bounds = array<i64: 1, 128>}, {pipeline_mode = #tpu.pipeline_mode<synchronous>, transform_indices = @transform_3, window_bounds = array<i64: 128, 128>}, {pipeline_mode = #tpu.pipeline_mode<synchronous>, transform_indices = @transform_4, window_bounds = array<i64: 1, 128>}, {transform_indices = @transform_5, window_bounds = array<i64: 1, 64, 128>}, {transform_indices = @transform_6, window_bounds = array<i64: 1, 64, 128>}]} {
    %c0_i32 = arith.constant 0 : i32
    %0 = arith.cmpi eq, %arg2, %c0_i32 : i32
    %1 = arith.extui %0 : i1 to i32
    %c0_i32_0 = arith.constant 0 : i32
    %2 = arith.cmpi ne, %1, %c0_i32_0 : i32
    scf.if %2 {
      %cst_11 = arith.constant 0.000000e+00 : f32
      %13 = vector.broadcast %cst_11 : f32 to vector<64x128xf32>
      %c0_12 = arith.constant 0 : index
      %c0_13 = arith.constant 0 : index
      %14 = vector.load %arg10[%c0_12, %c0_13] : memref<64x128xf32, #tpu.memory_space<vmem>>, vector<64x128xf32>
      tpu.vector_store %arg10[%c0_12, %c0_13], %13 {strides = array<i32>} : memref<64x128xf32, #tpu.memory_space<vmem>>, vector<64x128xf32>,
    } else {
    }
    %c0 = arith.constant 0 : index
    %c0_1 = arith.constant 0 : index
    %3 = vector.load %arg10[%c0, %c0_1] : memref<64x128xf32, #tpu.memory_space<vmem>>, vector<64x128xf32>
    %c0_2 = arith.constant 0 : index
    %c0_3 = arith.constant 0 : index
    %c0_4 = arith.constant 0 : index
    %4 = vector.load %arg3[%c0_2, %c0_3, %c0_4] : memref<1x64x128xbf16, #tpu.memory_space<vmem>>, vector<1x64x128xbf16>
    %5 = vector.shape_cast %4 : vector<1x64x128xbf16> to vector<64x128xbf16>
    %c0_5 = arith.constant 0 : index
    %c0_6 = arith.constant 0 : index
    %6 = vector.load %arg4[%c0_5, %c0_6] : memref<128x128xbf16, #tpu.memory_space<vmem>>, vector<128x128xbf16>
    %cst = arith.constant dense<0.000000e+00> : vector<64x128xf32>
    %7 = tpu.matmul %5, %6, %cst {dimension_numbers = #tpu.dot_dimension_numbers<[1], [0], [0], [1], [0, 0, 1, 1], [], []>} : vector<64x128xbf16>, vector<128x128xbf16>, vector<64x128xf32> -> vector<64x128xf32>
    %8 = arith.addf %3, %7 : vector<64x128xf32>
    %c0_7 = arith.constant 0 : index
    %c0_8 = arith.constant 0 : index
    %9 = vector.load %arg10[%c0_7, %c0_8] : memref<64x128xf32, #tpu.memory_space<vmem>>, vector<64x128xf32>
    tpu.vector_store %arg10[%c0_7, %c0_8], %8 {strides = array<i32>} : memref<64x128xf32, #tpu.memory_space<vmem>>, vector<64x128xf32>,
    %c0_i32_9 = arith.constant 0 : i32
    %10 = arith.cmpi eq, %arg2, %c0_i32_9 : i32
    %11 = arith.extui %10 : i1 to i32
    %c0_i32_10 = arith.constant 0 : i32
    %12 = arith.cmpi ne, %11, %c0_i32_10 : i32
    scf.if %12 {
      %c0_11 = arith.constant 0 : index
      %c0_12 = arith.constant 0 : index
      %13 = vector.load %arg10[%c0_11, %c0_12] : memref<64x128xf32, #tpu.memory_space<vmem>>, vector<64x128xf32>
      %c0_13 = arith.constant 0 : index
      %c0_14 = arith.constant 0 : index
      %14 = vector.load %arg5[%c0_13, %c0_14] : memref<1x128xf32, #tpu.memory_space<vmem>>, vector<1x128xf32>
      %15 = vector.broadcast %14 : vector<1x128xf32> to vector<64x128xf32>
      %16 = arith.addf %13, %15 : vector<64x128xf32>
      %17 = arith.negf %16 : vector<64x128xf32>
      %18 = math.exp %17 : vector<64x128xf32>
      %cst_15 = arith.constant 1.000000e+00 : f32
      %19 = vector.broadcast %cst_15 : f32 to vector<64x128xf32>
      %20 = arith.addf %19, %18 : vector<64x128xf32>
      %21 = arith.divf %19, %20 : vector<64x128xf32>
      %22 = arith.mulf %16, %21 : vector<64x128xf32>
      %23 = arith.truncf %22 : vector<64x128xf32> to vector<64x128xbf16>
      %c0_16 = arith.constant 0 : index
      %c0_17 = arith.constant 0 : index
      %c0_18 = arith.constant 0 : index
      %24 = vector.load %arg8[%c0_16, %c0_17, %c0_18] : memref<1x64x128xbf16, #tpu.memory_space<vmem>>, vector<1x64x128xbf16>
      %25 = vector.shape_cast %24 : vector<1x64x128xbf16> to vector<64x128xbf16>
      %26 = vector.shape_cast %23 : vector<64x128xbf16> to vector<1x64x128xbf16>
      tpu.vector_store %arg8[%c0_16, %c0_17, %c0_18], %26 {strides = array<i32>} : memref<1x64x128xbf16, #tpu.memory_space<vmem>>, vector<1x64x128xbf16>,
      %c0_19 = arith.constant 0 : index
      %c0_20 = arith.constant 0 : index
      %27 = vector.load %arg6[%c0_19, %c0_20] : memref<128x128xbf16, #tpu.memory_space<vmem>>, vector<128x128xbf16>
      %cst_21 = arith.constant dense<0.000000e+00> : vector<64x128xf32>
      %28 = tpu.matmul %23, %27, %cst_21 {dimension_numbers = #tpu.dot_dimension_numbers<[1], [0], [0], [1], [0, 0, 1, 1], [], []>} : vector<64x128xbf16>, vector<128x128xbf16>, vector<64x128xf32> -> vector<64x128xf32>
      %c0_22 = arith.constant 0 : index
      %c0_23 = arith.constant 0 : index
      %29 = vector.load %arg7[%c0_22, %c0_23] : memref<1x128xf32, #tpu.memory_space<vmem>>, vector<1x128xf32>
      %30 = vector.broadcast %29 : vector<1x128xf32> to vector<64x128xf32>
      %31 = arith.addf %28, %30 : vector<64x128xf32>
      %32 = arith.truncf %31 : vector<64x128xf32> to vector<64x128xbf16>
      %c0_24 = arith.constant 0 : index
      %c0_25 = arith.constant 0 : index
      %c0_26 = arith.constant 0 : index
      %33 = vector.load %arg9[%c0_24, %c0_25, %c0_26] : memref<1x64x128xbf16, #tpu.memory_space<vmem>>, vector<1x64x128xbf16>
      %34 = vector.shape_cast %33 : vector<1x64x128xbf16> to vector<64x128xbf16>
      %35 = vector.shape_cast %32 : vector<64x128xbf16> to vector<1x64x128xbf16>
      tpu.vector_store %arg9[%c0_24, %c0_25, %c0_26], %35 {strides = array<i32>} : memref<1x64x128xbf16, #tpu.memory_space<vmem>>, vector<1x64x128xbf16>,
    } else {
    }
    return
  }
  func.func @transform_0(%arg0: i32, %arg1: i32, %arg2: i32) -> (i32, i32, i32) {
    %c0_i32 = arith.constant 0 : i32
    return %arg0, %arg1, %arg2 : i32, i32, i32
  }
  func.func @transform_1(%arg0: i32, %arg1: i32, %arg2: i32) -> (i32, i32) {
    %c0_i32 = arith.constant 0 : i32
    %c0_i32_0 = arith.constant 0 : i32
    return %arg2, %c0_i32 : i32, i32
  }
  func.func @transform_2(%arg0: i32, %arg1: i32, %arg2: i32) -> (i32, i32) {
    %c0_i32 = arith.constant 0 : i32
    %c0_i32_0 = arith.constant 0 : i32
    %c0_i32_1 = arith.constant 0 : i32
    return %c0_i32, %c0_i32_0 : i32, i32
  }
  func.func @transform_3(%arg0: i32, %arg1: i32, %arg2: i32) -> (i32, i32) {
    %c0_i32 = arith.constant 0 : i32
    %c0_i32_0 = arith.constant 0 : i32
    %c0_i32_1 = arith.constant 0 : i32
    return %c0_i32, %c0_i32_0 : i32, i32
  }
  func.func @transform_4(%arg0: i32, %arg1: i32, %arg2: i32) -> (i32, i32) {
    %c0_i32 = arith.constant 0 : i32
    %c0_i32_0 = arith.constant 0 : i32
    %c0_i32_1 = arith.constant 0 : i32
    return %c0_i32, %c0_i32_0 : i32, i32
  }
  func.func @transform_5(%arg0: i32, %arg1: i32, %arg2: i32) -> (i32, i32, i32) {
    %c0_i32 = arith.constant 0 : i32
    %c0_i32_0 = arith.constant 0 : i32
    return %arg0, %arg1, %c0_i32 : i32, i32, i32
  }
  func.func @transform_6(%arg0: i32, %arg1: i32, %arg2: i32) -> (i32, i32, i32) {
    %c0_i32 = arith.constant 0 : i32
    %c0_i32_0 = arith.constant 0 : i32
    return %arg0, %arg1, %c0_i32 : i32, i32, i32
  }
}

</mosaic_0001>

<llo_original>
// kernel: tpu_custom_call.1
$region0: #{tpu_custom_call.1}
  #allocation0 [shape = 'u32[]', space=smem, size = 0x4, offset = 0x4, fixed_abs, tag = 'smem constant byte address 0x4 - core index']
  #allocation1 [shape = 'u32[144,128]{1,0:T(1,128)}', space=vmem, size = 0x12000, scoped, tag = 'internal scratch']
  #allocation2 [shape = 'f32[64,128]{1,0:T(8,128)}', space=vmem, size = 0x8000, scoped, tag = 'scratch operand']
  %s0 = inlined_call_operand.hbm [shape: bf16[2,64,128], index: 0, kind: input, shape index: {}]
  %s1 = inlined_call_operand.hbm [shape: bf16[128,128], index: 1, kind: input, shape index: {}]
  %s2 = inlined_call_operand.vmem [shape: f32[1,128], index: 2, kind: input, shape index: {}]
  %s3 = inlined_call_operand.hbm [shape: bf16[128,128], index: 3, kind: input, shape index: {}]
  %s4 = inlined_call_operand.vmem [shape: f32[1,128], index: 4, kind: input, shape index: {}]
  %s5 = inlined_call_operand.hbm [shape: bf16[2,64,128], index: 5, kind: output, shape index: {0}]
  %s6 = inlined_call_operand.hbm [shape: bf16[2,64,128], index: 6, kind: output, shape index: {1}]
  %7 = xla_tuple %s5, %s6
  %s8 = sld [smem:[#allocation0]]
  $region81: #{tpu_custom_call.1} parent=0
    _
  %s10 = ssub.s32 1, %s8
  %s11 = scalar_select 0, %s10, %s8
  $region1: #{tpu_custom_call.1} parent=0
    #allocation3 [shape = 'u8[32768]{0}', space=vmem, size = 0x8000, scoped, tag = 'input window, operand 0']
    #allocation4 [shape = 's32[2]{0}', space=sflag, size = 0x8, scoped, tag = 'scoped memory for tpu_custom_call.1']
    #allocation5 [shape = 's32[2]{0}', space=sflag, size = 0x8, scoped, tag = 'scoped memory for tpu_custom_call.1']
    #allocation6 [shape = 'u8[32768]{0}', space=vmem, size = 0x8000, scoped, tag = 'input window, operand 1, single buffered']
    #allocation7 [shape = 's32[1]{0}', space=sflag, size = 0x4, scoped, tag = 'scoped memory for tpu_custom_call.1']
    #allocation8 [shape = 'u8[32768]{0}', space=vmem, size = 0x8000, scoped, tag = 'input window, operand 3, single buffered']
    #allocation9 [shape = 'u8[32768]{0}', space=vmem, size = 0x8000, scoped, tag = 'output window, operand 0']
    #allocation10 [shape = 'u8[32768]{0}', space=vmem, size = 0x8000, scoped, tag = 'output window, operand 1']
    #allocation11 [shape = 's32[2]{0}', space=sflag, size = 0x8, scoped, tag = 'scoped memory for tpu_custom_call.1']
    %12 = vsyncpa [#allocation4], 0
    %s13 = scalar_lea.sflag [#allocation4], 1
    %14 = vsyncpa %s13, 0
    %15 = vsyncpa [#allocation7], 0
    %16 = vsyncpa [#allocation5], 0
    %s17 = scalar_lea.sflag [#allocation5], 1
    %18 = vsyncpa %s17, 0
    %19 = vsyncpa [#allocation11], 0
    %s20 = scalar_lea.sflag [#allocation11], 1
    %21 = vsyncpa %s20, 0
    loop: start=0, step=1, limit=4
    $region2: #{tpu_custom_call.1} parent=1 // loop_pre_header
      _
    $region3: #{tpu_custom_call.1} parent=1 // loop_header
      %s23 = sphi 0, %s27
      %p24 = scmp.ge.s32.totalorder %s23, 4
      %s30 = sphi 0, %s49
      %s31 = sphi 0, %s45
      %s32 = sphi 0, %s41
      %s33 = sphi 0, %s30
      %s34 = sphi 0, %s31
      %s35 = sphi 0, %s32
      %s36 = sphi 0, %s33
      %s37 = sphi 0, %s34
      %s38 = sphi 0, %s35
      %s56 = sphi 0, %s58
      %s59 = sphi 0, %s56
      %s60 = sphi 0, %s59
      %s76 = sphi 0, %s60
      %s82 = sphi 0, %s84
      %s85 = sphi 0, %s82
      %s86 = sphi 0, %s85
      %s102 = sphi 0, %s86
      %s106 = sphi 0, %s106
      %s108 = sphi 0, %s106
      %s109 = sphi 0, %s108
      %s123 = sphi 0, %s109
      %s127 = sphi 0, %s127
      %s129 = sphi 0, %s127
      %s130 = sphi 0, %s129
      %s144 = sphi 0, %s130
      %s148 = sphi 0, %s148
      %s150 = sphi 0, %s148
      %s151 = sphi 0, %s150
      %s165 = sphi 0, %s151
      %s173 = sphi 0, %s175
      %s176 = sphi 0, %s173
      %s177 = sphi 0, %s176
      %s193 = sphi 0, %s177
      %s201 = sphi 0, %s203
      %s204 = sphi 0, %s201
      %s205 = sphi 0, %s204
      %s221 = sphi 0, %s205
    $region4: #{tpu_custom_call.1} parent=1 // loop_header_branch
      %26 = sbr.rel (%p24) target = $region8
    $region5: #{tpu_custom_call.1} parent=1 // loop_body
      %s28 = ssub.s32 %s23, 1
      %s29 = ssub.s32 %s23, 2
      %s39 = sadd.s32 1, %s32
      %p40 = scmp.ge.s32.totalorder %s39, 1
      %s41 = scalar_select %p40, 0, %s39
      %s42 = sadd.s32 1, %s31
      %s43 = scalar_select %p40, %s42, %s31
      %p44 = scmp.ge.s32.totalorder %s43, 1
      %s45 = scalar_select %p44, 0, %s43
      %s46 = sadd.s32 1, %s30
      %s47 = scalar_select %p44, %s46, %s30
      %p48 = scmp.ge.s32.totalorder %s47, 2
      %s49 = scalar_select %p48, 0, %s47
      %s50 = ssub.s32 %s30, %s49
      %s51 = ssub.s32 %s31, %s45
      %s52 = sor.u32 %s50, %s51
      %s53 = ssub.s32 %s32, %s41
      %s54 = sor.u32 %s52, %s53
      %p55 = scmp.eq.s32.totalorder %s54, 0
      %s57 = sadd.s32 %s56, 1
      %s58 = scalar_select %p55, %s56, %s57
      %p61 = pneg %p55
      %p62 = scmp.eq.s32.totalorder %s23, 1
      %p63 = por %p61, %p62
      %p64 = scmp.ne.s32.totalorder %s56, %s59
      %p65 = scmp.eq.s32.totalorder %s23, 0
      %p66 = por %p64, %p65
      %p67 = scmp.ne.s32.totalorder %s56, %s59
      %p68 = scmp.eq.s32.totalorder %s28, 1
      %p69 = por %p67, %p68
      %p70 = scmp.ne.s32.totalorder %s59, %s60
      %p71 = scmp.eq.s32.totalorder %s28, 0
      %p72 = por %p70, %p71
      %p73 = scmp.ne.s32.totalorder %s59, %s60
      %p74 = scmp.eq.s32.totalorder %s29, 1
      %p75 = por %p73, %p74
      %p77 = scmp.ne.s32.totalorder %s60, %s76
      %p78 = scmp.eq.s32.totalorder %s29, 0
      %p79 = por %p77, %p78
      %s80 = ssub.s32 %s32, %s41
      %p81 = scmp.eq.s32.totalorder %s80, 0
      %s83 = sadd.s32 %s82, 1
      %s84 = scalar_select %p81, %s82, %s83
      %p87 = pneg %p81
      %p88 = scmp.eq.s32.totalorder %s23, 1
      %p89 = por %p87, %p88
      %p90 = scmp.ne.s32.totalorder %s82, %s85
      %p91 = scmp.eq.s32.totalorder %s23, 0
      %p92 = por %p90, %p91
      %p93 = scmp.ne.s32.totalorder %s82, %s85
      %p94 = scmp.eq.s32.totalorder %s28, 1
      %p95 = por %p93, %p94
      %p96 = scmp.ne.s32.totalorder %s85, %s86
      %p97 = scmp.eq.s32.totalorder %s28, 0
      %p98 = por %p96, %p97
      %p99 = scmp.ne.s32.totalorder %s85, %s86
      %p100 = scmp.eq.s32.totalorder %s29, 1
      %p101 = por %p99, %p100
      %p103 = scmp.ne.s32.totalorder %s86, %s102
      %p104 = scmp.eq.s32.totalorder %s29, 0
      %p105 = por %p103, %p104
      %s107 = sadd.s32 %s106, 1
      %p110 = scmp.eq.s32.totalorder %s23, 1
      %p111 = scmp.ne.s32.totalorder %s106, %s108
      %p112 = scmp.eq.s32.totalorder %s23, 0
      %p113 = por %p111, %p112
      %p114 = scmp.ne.s32.totalorder %s106, %s108
      %p115 = scmp.eq.s32.totalorder %s28, 1
      %p116 = por %p114, %p115
      %p117 = scmp.ne.s32.totalorder %s108, %s109
      %p118 = scmp.eq.s32.totalorder %s28, 0
      %p119 = por %p117, %p118
      %p120 = scmp.ne.s32.totalorder %s108, %s109
      %p121 = scmp.eq.s32.totalorder %s29, 1
      %p122 = por %p120, %p121
      %p124 = scmp.ne.s32.totalorder %s109, %s123
      %p125 = scmp.eq.s32.totalorder %s29, 0
      %p126 = por %p124, %p125
      %s128 = sadd.s32 %s127, 1
      %p131 = scmp.eq.s32.totalorder %s23, 1
      %p132 = scmp.ne.s32.totalorder %s127, %s129
      %p133 = scmp.eq.s32.totalorder %s23, 0
      %p134 = por %p132, %p133
      %p135 = scmp.ne.s32.totalorder %s127, %s129
      %p136 = scmp.eq.s32.totalorder %s28, 1
      %p137 = por %p135, %p136
      %p138 = scmp.ne.s32.totalorder %s129, %s130
      %p139 = scmp.eq.s32.totalorder %s28, 0
      %p140 = por %p138, %p139
      %p141 = scmp.ne.s32.totalorder %s129, %s130
      %p142 = scmp.eq.s32.totalorder %s29, 1
      %p143 = por %p141, %p142
      %p145 = scmp.ne.s32.totalorder %s130, %s144
      %p146 = scmp.eq.s32.totalorder %s29, 0
      %p147 = por %p145, %p146
      %s149 = sadd.s32 %s148, 1
      %p152 = scmp.eq.s32.totalorder %s23, 1
      %p153 = scmp.ne.s32.totalorder %s148, %s150
      %p154 = scmp.eq.s32.totalorder %s23, 0
      %p155 = por %p153, %p154
      %p156 = scmp.ne.s32.totalorder %s148, %s150
      %p157 = scmp.eq.s32.totalorder %s28, 1
      %p158 = por %p156, %p157
      %p159 = scmp.ne.s32.totalorder %s150, %s151
      %p160 = scmp.eq.s32.totalorder %s28, 0
      %p161 = por %p159, %p160
      %p162 = scmp.ne.s32.totalorder %s150, %s151
      %p163 = scmp.eq.s32.totalorder %s29, 1
      %p164 = por %p162, %p163
      %p166 = scmp.ne.s32.totalorder %s151, %s165
      %p167 = scmp.eq.s32.totalorder %s29, 0
      %p168 = por %p166, %p167
      %s169 = ssub.s32 %s30, %s49
      %s170 = ssub.s32 %s31, %s45
      %s171 = sor.u32 %s169, %s170
      %p172 = scmp.eq.s32.totalorder %s171, 0
      %s174 = sadd.s32 %s173, 1
      %s175 = scalar_select %p172, %s173, %s174
      %p178 = pneg %p172
      %p179 = scmp.eq.s32.totalorder %s23, 1
      %p180 = por %p178, %p179
      %p181 = scmp.ne.s32.totalorder %s173, %s176
      %p182 = scmp.eq.s32.totalorder %s23, 0
      %p183 = por %p181, %p182
      %p184 = scmp.ne.s32.totalorder %s173, %s176
      %p185 = scmp.eq.s32.totalorder %s28, 1
      %p186 = por %p184, %p185
      %p187 = scmp.ne.s32.totalorder %s176, %s177
      %p188 = scmp.eq.s32.totalorder %s28, 0
      %p189 = por %p187, %p188
      %p190 = scmp.ne.s32.totalorder %s176, %s177
      %p191 = scmp.eq.s32.totalorder %s29, 1
      %p192 = por %p190, %p191
      %p194 = scmp.ne.s32.totalorder %s177, %s193
      %p195 = scmp.eq.s32.totalorder %s29, 0
      %p196 = por %p194, %p195
      %s197 = ssub.s32 %s30, %s49
      %s198 = ssub.s32 %s31, %s45
      %s199 = sor.u32 %s197, %s198
      %p200 = scmp.eq.s32.totalorder %s199, 0
      %s202 = sadd.s32 %s201, 1
      %s203 = scalar_select %p200, %s201, %s202
      %p206 = pneg %p200
      %p207 = scmp.eq.s32.totalorder %s23, 1
      %p208 = por %p206, %p207
      %p209 = scmp.ne.s32.totalorder %s201, %s204
      %p210 = scmp.eq.s32.totalorder %s23, 0
      %p211 = por %p209, %p210
      %p212 = scmp.ne.s32.totalorder %s201, %s204
      %p213 = scmp.eq.s32.totalorder %s28, 1
      %p214 = por %p212, %p213
      %p215 = scmp.ne.s32.totalorder %s204, %s205
      %p216 = scmp.eq.s32.totalorder %s28, 0
      %p217 = por %p215, %p216
      %p218 = scmp.ne.s32.totalorder %s204, %s205
      %p219 = scmp.eq.s32.totalorder %s29, 1
      %p220 = por %p218, %p219
      %p222 = scmp.ne.s32.totalorder %s205, %s221
      %p223 = scmp.eq.s32.totalorder %s29, 0
      %p224 = por %p222, %p223
      %p225 = scmp.le.s32.totalorder 1, %s23
      %p226 = scmp.lt.s32.totalorder %s23, 3
      %p227 = pnand %p225, %p226
      %p228 = pneg %p227
      // Predicated region
      $region9: #{tpu_custom_call.1} parent=5 // pred_check
        _
      $region10: #{tpu_custom_call.1} parent=5 // pred_check_branch
        %230 = sbr.rel (%p227) target = $region12
      $region11: #{tpu_custom_call.1} parent=5 // pred_region
        %s231 = ssub.s32 %s23, 1
        // Predicated region
        $region13: #{tpu_custom_call.1} parent=11 // pred_check
          %p232 = pneg %p98
        $region14: #{tpu_custom_call.1} parent=11 // pred_check_branch
          %234 = sbr.rel (%p232) target = $region16
        $region15: #{tpu_custom_call.1} parent=11 // pred_region
          %s235 = smul.u32 16, %s35
          %s237 = ssub.s32 1024, 1024
          %238 = vsyncadd [#allocation7], %s237
          %s239 = smul.addr %s235, 64
          %s240 = scalar_lea.hbm %s1, %s239
          %s241 = sshll.u32 [#allocation6], 4
          %s242 = int_to_ptr.vmem [resolvable:$true] %s241
          %247 = dma.hbm_to_vmem [thread:$0]  %s240, 1024, %s242, [#allocation7], 64, 64, 4
        $region16: #{tpu_custom_call.1} parent=11 // pred_fallthru
          _
        // Predicated region
        $region17: #{tpu_custom_call.1} parent=11 // pred_check
          %p248 = pneg %p119
        $region18: #{tpu_custom_call.1} parent=11 // pred_check_branch
          %250 = sbr.rel (%p248) target = $region20
        $region19: #{tpu_custom_call.1} parent=11 // pred_region
          _
        $region20: #{tpu_custom_call.1} parent=11 // pred_fallthru
          _
        // Predicated region
        $region21: #{tpu_custom_call.1} parent=11 // pred_check
          %p251 = pneg %p140
        $region22: #{tpu_custom_call.1} parent=11 // pred_check_branch
          %253 = sbr.rel (%p251) target = $region24
        $region23: #{tpu_custom_call.1} parent=11 // pred_region
          %s255 = ssub.s32 1024, 1024
          %256 = vsyncadd [#allocation7], %s255
          %s257 = sshll.u32 [#allocation8], 4
          %s258 = int_to_ptr.vmem [resolvable:$true] %s257
          %263 = dma.hbm_to_vmem [thread:$0]  %s3, 1024, %s258, [#allocation7], 64, 64, 4
        $region24: #{tpu_custom_call.1} parent=11 // pred_fallthru
          _
        // Predicated region
        $region25: #{tpu_custom_call.1} parent=11 // pred_check
          %p264 = pneg %p161
        $region26: #{tpu_custom_call.1} parent=11 // pred_check_branch
          %266 = sbr.rel (%p264) target = $region28
        $region27: #{tpu_custom_call.1} parent=11 // pred_region
          _
        $region28: #{tpu_custom_call.1} parent=11 // pred_fallthru
          _
      $region12: #{tpu_custom_call.1} parent=5 // pred_fallthru
        _
      %p267 = scmp.lt.s32.totalorder %s23, 2
      // Predicated region
      $region29: #{tpu_custom_call.1} parent=5 // pred_check
        %p268 = pneg %p267
      $region30: #{tpu_custom_call.1} parent=5 // pred_check_branch
        %270 = sbr.rel (%p268) target = $region32
      $region31: #{tpu_custom_call.1} parent=5 // pred_region
        // Predicated region
        $region33: #{tpu_custom_call.1} parent=31 // pred_check
          %p271 = pneg %p66
        $region34: #{tpu_custom_call.1} parent=31 // pred_check_branch
          %273 = sbr.rel (%p271) target = $region36
        $region35: #{tpu_custom_call.1} parent=31 // pred_region
          %s274 = sand.u32 %s56, 1
          %s275 = scalar_lea.sflag [#allocation4], %s274
          %s276 = sand.u32 %s56, 1
          %s277 = smul.addr %s276, 32
          %s278 = scalar_lea.vmem [#allocation3], %s277
          %s279 = smul.u32 8, %s31
          %s281 = ssub.s32 512, 512
          %282 = vsyncadd %s275, %s281
          %s283 = sadd.s32 %s32, %s279
          %s284 = smul.addr %s30, 8
          %s285 = sadd.s32 %s283, %s284
          %s286 = smul.addr %s285, 64
          %s287 = scalar_lea.hbm %s0, %s286
          %s288 = sshll.u32 %s278, 4
          %s289 = int_to_ptr.vmem [resolvable:$true] %s288
          %294 = dma.hbm_to_vmem [thread:$0]  %s287, 512, %s289, %s275, 64, 64, 4
        $region36: #{tpu_custom_call.1} parent=31 // pred_fallthru
          _
      $region32: #{tpu_custom_call.1} parent=5 // pred_fallthru
        _
      %p295 = scmp.le.s32.totalorder 1, %s23
      %p296 = scmp.lt.s32.totalorder %s23, 3
      %p297 = pnand %p295, %p296
      %p298 = pneg %p297
      // Predicated region
      $region37: #{tpu_custom_call.1} parent=5 // pred_check
        _
      $region38: #{tpu_custom_call.1} parent=5 // pred_check_branch
        %300 = sbr.rel (%p297) target = $region40
      $region39: #{tpu_custom_call.1} parent=5 // pred_region
        %s301 = ssub.s32 %s23, 1
        %s302 = sand.u32 %s59, 1
        %s303 = scalar_lea.sflag [#allocation4], %s302
        %s304 = sand.u32 %s59, 1
        %s305 = smul.addr %s304, 32
        %s306 = scalar_lea.vmem [#allocation3], %s305
        // Predicated region
        $region41: #{tpu_custom_call.1} parent=39 // pred_check
          %p307 = pneg %p72
        $region42: #{tpu_custom_call.1} parent=39 // pred_check_branch
          %309 = sbr.rel (%p307) target = $region44
        $region43: #{tpu_custom_call.1} parent=39 // pred_region
          %310 = dma.done %s303, 512
        $region44: #{tpu_custom_call.1} parent=39 // pred_fallthru
          _
        // Predicated region
        $region45: #{tpu_custom_call.1} parent=39 // pred_check
          %p311 = pneg %p98
        $region46: #{tpu_custom_call.1} parent=39 // pred_check_branch
          %313 = sbr.rel (%p311) target = $region48
        $region47: #{tpu_custom_call.1} parent=39 // pred_region
          %314 = dma.done [#allocation7], 1024
        $region48: #{tpu_custom_call.1} parent=39 // pred_fallthru
          _
        // Predicated region
        $region49: #{tpu_custom_call.1} parent=39 // pred_check
          %p315 = pneg %p140
        $region50: #{tpu_custom_call.1} parent=39 // pred_check_branch
          %317 = sbr.rel (%p315) target = $region52
        $region51: #{tpu_custom_call.1} parent=39 // pred_region
          %318 = dma.done [#allocation7], 1024
        $region52: #{tpu_custom_call.1} parent=39 // pred_fallthru
          _
        %s319 = sand.u32 %s59, 1
        %s320 = scalar_lea.sflag [#allocation4], %s319
        %s321 = sand.u32 %s59, 1
        %s322 = smul.addr %s321, 32
        %s323 = scalar_lea.vmem [#allocation3], %s322
        %p324 = pneg %p72
        %p325 = pneg %p69
        %p326 = pneg %p98
        %p327 = pneg %p95
        %p328 = pneg %p119
        %p329 = pneg %p116
        %p330 = pneg %p140
        %p331 = pneg %p137
        %p332 = pneg %p161
        %p333 = pneg %p158
        %p334 = pneg %p189
        %p335 = pneg %p186
        %s336 = sand.u32 %s176, 1
        %s337 = scalar_lea.sflag [#allocation5], %s336
        %s338 = sand.u32 %s176, 1
        %s339 = smul.addr %s338, 32
        %s340 = scalar_lea.vmem [#allocation9], %s339
        %p341 = pneg %p217
        %p342 = pneg %p214
        %s343 = sand.u32 %s204, 1
        %s344 = scalar_lea.sflag [#allocation11], %s343
        %s345 = sand.u32 %s204, 1
        %s346 = smul.addr %s345, 32
        %s347 = scalar_lea.vmem [#allocation10], %s346
        %s348 = smul.u32 8, %s34
        %s349 = smul.u32 16, %s35
        %s350 = smul.u32 8, %s34
        %s351 = smul.u32 8, %s34
        %p353 = scmp.eq.s32.totalorder %s35, 0
        // Predicated region
        $region53: #{tpu_custom_call.1} parent=39 // pred_check
          %p354 = pneg %p353
        $region54: #{tpu_custom_call.1} parent=39 // pred_check_branch
          %356 = sbr.rel (%p354) target = $region56
        $region55: #{tpu_custom_call.1} parent=39 // pred_region
          %357 = vst [vmem:[#allocation2] sm:$0xff] 0.0
          %358 = vst [vmem:[#allocation2 + $0x8] sm:$0xff] 0.0
          %359 = vst [vmem:[#allocation2 + $0x10] sm:$0xff] 0.0
          %360 = vst [vmem:[#allocation2 + $0x18] sm:$0xff] 0.0
          %361 = vst [vmem:[#allocation2 + $0x20] sm:$0xff] 0.0
          %362 = vst [vmem:[#allocation2 + $0x28] sm:$0xff] 0.0
          %363 = vst [vmem:[#allocation2 + $0x30] sm:$0xff] 0.0
          %364 = vst [vmem:[#allocation2 + $0x38] sm:$0xff] 0.0
        $region56: #{tpu_custom_call.1} parent=39 // pred_fallthru
          _
        %v365 = vld [vmem:[#allocation2] sm:$0xff]
        %v366 = vld [vmem:[#allocation2 + $0x8] sm:$0xff]
        %v367 = vld [vmem:[#allocation2 + $0x10] sm:$0xff]
        %v368 = vld [vmem:[#allocation2 + $0x18] sm:$0xff]
        %v369 = vld [vmem:[#allocation2 + $0x20] sm:$0xff]
        %v370 = vld [vmem:[#allocation2 + $0x28] sm:$0xff]
        %v371 = vld [vmem:[#allocation2 + $0x30] sm:$0xff]
        %v372 = vld [vmem:[#allocation2 + $0x38] sm:$0xff]
        %v373 = vld [vmem:[%s306] sm:$0xf]
        %v374 = vld [vmem:[%s306 + $0x4] sm:$0xf]
        %v375 = vld [vmem:[%s306 + $0x8] sm:$0xf]
        %v376 = vld [vmem:[%s306 + $0xc] sm:$0xf]
        %v377 = vld [vmem:[%s306 + $0x10] sm:$0xf]
        %v378 = vld [vmem:[%s306 + $0x14] sm:$0xf]
        %v379 = vld [vmem:[%s306 + $0x18] sm:$0xf]
        %v380 = vld [vmem:[%s306 + $0x1c] sm:$0xf]
        %v381 = vld [vmem:[#allocation6] sm:$0xf]
        %v382 = vld [vmem:[#allocation6 + $0x4] sm:$0xf]
        %v383 = vld [vmem:[#allocation6 + $0x8] sm:$0xf]
        %v384 = vld [vmem:[#allocation6 + $0xc] sm:$0xf]
        %v385 = vld [vmem:[#allocation6 + $0x10] sm:$0xf]
        %v386 = vld [vmem:[#allocation6 + $0x14] sm:$0xf]
        %v387 = vld [vmem:[#allocation6 + $0x18] sm:$0xf]
        %v388 = vld [vmem:[#allocation6 + $0x1c] sm:$0xf]
        %v389 = vld [vmem:[#allocation6 + $0x20] sm:$0xf]
        %v390 = vld [vmem:[#allocation6 + $0x24] sm:$0xf]
        %v391 = vld [vmem:[#allocation6 + $0x28] sm:$0xf]
        %v392 = vld [vmem:[#allocation6 + $0x2c] sm:$0xf]
        %v393 = vld [vmem:[#allocation6 + $0x30] sm:$0xf]
        %v394 = vld [vmem:[#allocation6 + $0x34] sm:$0xf]
        %v395 = vld [vmem:[#allocation6 + $0x38] sm:$0xf]
        %v396 = vld [vmem:[#allocation6 + $0x3c] sm:$0xf]
        %v405 = vunpack.c.l.b16 %v373
        %v406 = vunpack.c.l.b16 %v374
        %v407 = vunpack.c.l.b16 %v375
        %v408 = vunpack.c.l.b16 %v376
        %v409 = vunpack.c.l.b16 %v377
        %v410 = vunpack.c.l.b16 %v378
        %v411 = vunpack.c.l.b16 %v379
        %v412 = vunpack.c.l.b16 %v380
        %v413 = vpack.c.b16 %v406, %v405
        %v414 = vpack.c.b16 %v408, %v407
        %v415 = vpack.c.b16 %v410, %v409
        %v416 = vpack.c.b16 %v412, %v411
        %v437 = vunpack.c.l.b16 %v381
        %v438 = vunpack.c.l.b16 %v382
        %v439 = vunpack.c.l.b16 %v383
        %v440 = vunpack.c.l.b16 %v384
        %v441 = vunpack.c.l.b16 %v385
        %v442 = vunpack.c.l.b16 %v386
        %v443 = vunpack.c.l.b16 %v387
        %v444 = vunpack.c.l.b16 %v388
        %v445 = vunpack.c.l.b16 %v389
        %v446 = vunpack.c.l.b16 %v390
        %v447 = vunpack.c.l.b16 %v391
        %v448 = vunpack.c.l.b16 %v392
        %v449 = vunpack.c.l.b16 %v393
        %v450 = vunpack.c.l.b16 %v394
        %v451 = vunpack.c.l.b16 %v395
        %v452 = vunpack.c.l.b16 %v396
        %v453 = vpack.c.b16 %v438, %v437
        %v454 = vpack.c.b16 %v440, %v439
        %v455 = vpack.c.b16 %v442, %v441
        %v456 = vpack.c.b16 %v444, %v443
        %v457 = vpack.c.b16 %v446, %v445
        %v458 = vpack.c.b16 %v448, %v447
        %v459 = vpack.c.b16 %v450, %v449
        %v460 = vpack.c.b16 %v452, %v451
        %469 = vmatprep.subr.bf16.mxu0 0
        %470 = vmatpush1.bf16.msra.mxu0 %v453
        %471 = vmatprep.subr.bf16.mxu0 0
        %472 = vmatpush1.bf16.msra.mxu0 %v454
        %473 = vmatprep.subr.bf16.mxu0 0
        %474 = vmatpush1.bf16.msra.mxu0 %v455
        %475 = vmatprep.subr.bf16.mxu0 0
        %476 = vmatpush1.bf16.msra.mxu0 %v456
        %477 = vmatprep.subr.bf16.mxu0 0
        %478 = vmatpush1.bf16.msra.mxu0 %v457
        %479 = vmatprep.subr.bf16.mxu0 0
        %480 = vmatpush1.bf16.msra.mxu0 %v458
        %481 = vmatprep.subr.bf16.mxu0 0
        %482 = vmatpush1.bf16.msra.mxu0 %v459
        %483 = vmatprep.subr.bf16.mxu0 0
        %484 = vmatpush1.bf16.msra.mxu0 %v460
        %485 = vmatprep.subr.bf16.mxu0 0
        %486 = vmatpush1.bf16.msra.mxu0 0
        %487 = vmatprep.subr.bf16.mxu0 0
        %488 = vmatpush1.bf16.msra.mxu0 0
        %489 = vmatprep.subr.bf16.mxu0 0
        %490 = vmatpush1.bf16.msra.mxu0 0
        %491 = vmatprep.subr.bf16.mxu0 0
        %492 = vmatpush1.bf16.msra.mxu0 0
        %493 = vmatprep.subr.bf16.mxu0 0
        %494 = vmatpush1.bf16.msra.mxu0 0
        %495 = vmatprep.subr.bf16.mxu0 0
        %496 = vmatpush1.bf16.msra.mxu0 0
        %497 = vmatprep.subr.bf16.mxu0 0
        %498 = vmatpush1.bf16.msra.mxu0 0
        %499 = vmatprep.subr.bf16.mxu0 0
        %500 = vmatpush1.bf16.msra.mxu0 0
        %501 = vmatprep.mubr.bf16.mxu0 0
        %502 = vmatmul.mubr.bf16.gmra.mrb[0].mxu0 %v413
        %v503 = vpop.f32.mrb[0].mxu0
        %v504 = vadd.f32 0.0, %v503
        %v505 = vpop.f32.mrb[0].mxu0
        %v506 = vpop.f32.mrb[0].mxu0
        %v507 = vadd.f32 0.0, %v506
        %v508 = vpop.f32.mrb[0].mxu0
        %509 = vmatprep.mubr.bf16.mxu0 0
        %510 = vmatmul.mubr.bf16.gmra.mrb[0].mxu0 %v414
        %v511 = vpop.f32.mrb[0].mxu0
        %v512 = vadd.f32 0.0, %v511
        %v513 = vpop.f32.mrb[0].mxu0
        %v514 = vpop.f32.mrb[0].mxu0
        %v515 = vadd.f32 0.0, %v514
        %v516 = vpop.f32.mrb[0].mxu0
        %517 = vmatprep.mubr.bf16.mxu0 0
        %518 = vmatmul.mubr.bf16.gmra.mrb[0].mxu0 %v415
        %v519 = vpop.f32.mrb[0].mxu0
        %v520 = vadd.f32 0.0, %v519
        %v521 = vpop.f32.mrb[0].mxu0
        %v522 = vpop.f32.mrb[0].mxu0
        %v523 = vadd.f32 0.0, %v522
        %v524 = vpop.f32.mrb[0].mxu0
        %525 = vmatprep.mubr.bf16.mxu0 0
        %526 = vmatmul.mubr.bf16.gmra.mrb[0].mxu0 %v416
        %v527 = vpop.f32.mrb[0].mxu0
        %v528 = vadd.f32 0.0, %v527
        %v529 = vpop.f32.mrb[0].mxu0
        %v530 = vpop.f32.mrb[0].mxu0
        %v531 = vadd.f32 0.0, %v530
        %v532 = vpop.f32.mrb[0].mxu0
        %533 = vdwg.mxu0
        %v534 = vadd.f32 %v365, %v504
        %v535 = vadd.f32 %v366, %v507
        %v536 = vadd.f32 %v367, %v512
        %v537 = vadd.f32 %v368, %v515
        %v538 = vadd.f32 %v369, %v520
        %v539 = vadd.f32 %v370, %v523
        %v540 = vadd.f32 %v371, %v528
        %v541 = vadd.f32 %v372, %v531
        %542 = vst [vmem:[#allocation2] sm:$0xff] %v534
        %543 = vst [vmem:[#allocation2 + $0x8] sm:$0xff] %v535
        %544 = vst [vmem:[#allocation2 + $0x10] sm:$0xff] %v536
        %545 = vst [vmem:[#allocation2 + $0x18] sm:$0xff] %v537
        %546 = vst [vmem:[#allocation2 + $0x20] sm:$0xff] %v538
        %547 = vst [vmem:[#allocation2 + $0x28] sm:$0xff] %v539
        %548 = vst [vmem:[#allocation2 + $0x30] sm:$0xff] %v540
        %549 = vst [vmem:[#allocation2 + $0x38] sm:$0xff] %v541
        // Predicated region
        $region57: #{tpu_custom_call.1} parent=39 // pred_check
          %p550 = pneg %p353
        $region58: #{tpu_custom_call.1} parent=39 // pred_check_branch
          %552 = sbr.rel (%p550) target = $region60
        $region59: #{tpu_custom_call.1} parent=39 // pred_region
          %v553 = vld [vmem:[#allocation2] sm:$0xff]
          %v554 = vld [vmem:[#allocation2 + $0x8] sm:$0xff]
          %v555 = vld [vmem:[#allocation2 + $0x10] sm:$0xff]
          %v556 = vld [vmem:[#allocation2 + $0x18] sm:$0xff]
          %v557 = vld [vmem:[#allocation2 + $0x20] sm:$0xff]
          %v558 = vld [vmem:[#allocation2 + $0x28] sm:$0xff]
          %v559 = vld [vmem:[#allocation2 + $0x30] sm:$0xff]
          %v560 = vld [vmem:[#allocation2 + $0x38] sm:$0xff]
          %v561 = vld [vmem:[%s2] sm:$0x1]
          %v563 = vlaneseq
          %v564 = vshrl.u32 %v563, 7
          %v565 = vsub.s32 0, %v564
          %v566 = vrot.slane %v561, %v565
          %v568 = vadd.f32 %v553, %v566
          %v569 = vadd.f32 %v554, %v566
          %v570 = vadd.f32 %v555, %v566
          %v571 = vadd.f32 %v556, %v566
          %v572 = vadd.f32 %v557, %v566
          %v573 = vadd.f32 %v558, %v566
          %v574 = vadd.f32 %v559, %v566
          %v575 = vadd.f32 %v560, %v566
          %v576 = vxor.u32 %v568, 2147483648
          %v577 = vxor.u32 %v569, 2147483648
          %v578 = vxor.u32 %v570, 2147483648
          %v579 = vxor.u32 %v571, 2147483648
          %v580 = vxor.u32 %v572, 2147483648
          %v581 = vxor.u32 %v573, 2147483648
          %v582 = vxor.u32 %v574, 2147483648
          %v583 = vxor.u32 %v575, 2147483648
          %v584 = vmul.f32 %v576, 1.442695
          %v585 = vpow.pop %v584
          %v586 = vmul.f32 %v577, 1.442695
          %v587 = vpow.pop %v586
          %v588 = vmul.f32 %v578, 1.442695
          %v589 = vpow.pop %v588
          %v590 = vmul.f32 %v579, 1.442695
          %v591 = vpow.pop %v590
          %v592 = vmul.f32 %v580, 1.442695
          %v593 = vpow.pop %v592
          %v594 = vmul.f32 %v581, 1.442695
          %v595 = vpow.pop %v594
          %v596 = vmul.f32 %v582, 1.442695
          %v597 = vpow.pop %v596
          %v598 = vmul.f32 %v583, 1.442695
          %v599 = vpow.pop %v598
          %v600 = vadd.f32 %v585, 1.0
          %v601 = vadd.f32 %v587, 1.0
          %v602 = vadd.f32 %v589, 1.0
          %v603 = vadd.f32 %v591, 1.0
          %v604 = vadd.f32 %v593, 1.0
          %v605 = vadd.f32 %v595, 1.0
          %v606 = vadd.f32 %v597, 1.0
          %v607 = vadd.f32 %v599, 1.0
          %v608 = vrcp.pop %v600
          %v609 = vmul.f32 1.0, %v608
          %v610 = vrcp.pop %v601
          %v611 = vmul.f32 1.0, %v610
          %v612 = vrcp.pop %v602
          %v613 = vmul.f32 1.0, %v612
          %v614 = vrcp.pop %v603
          %v615 = vmul.f32 1.0, %v614
          %v616 = vrcp.pop %v604
          %v617 = vmul.f32 1.0, %v616
          %v618 = vrcp.pop %v605
          %v619 = vmul.f32 1.0, %v618
          %v620 = vrcp.pop %v606
          %v621 = vmul.f32 1.0, %v620
          %v622 = vrcp.pop %v607
          %v623 = vmul.f32 1.0, %v622
          %v624 = vmul.f32 %v568, %v609
          %v625 = vmul.f32 %v569, %v611
          %v626 = vmul.f32 %v570, %v613
          %v627 = vmul.f32 %v571, %v615
          %v628 = vmul.f32 %v572, %v617
          %v629 = vmul.f32 %v573, %v619
          %v630 = vmul.f32 %v574, %v621
          %v631 = vmul.f32 %v575, %v623
          %v632 = vpack.c.bf16 %v625, %v624
          %v633 = vpack.c.bf16 %v627, %v626
          %v634 = vpack.c.bf16 %v629, %v628
          %v635 = vpack.c.bf16 %v631, %v630
          %v640 = vunpack.c.l.b16 %v632
          %v641 = vunpack.c.h.b16 %v632
          %v642 = vunpack.c.l.b16 %v633
          %v643 = vunpack.c.h.b16 %v633
          %v644 = vunpack.c.l.b16 %v634
          %v645 = vunpack.c.h.b16 %v634
          %v646 = vunpack.c.l.b16 %v635
          %v647 = vunpack.c.h.b16 %v635
          %v648 = vpack.c.b16 %v640, %v640
          %v649 = vpack.c.b16 %v641, %v641
          %v650 = vpack.c.b16 %v642, %v642
          %v651 = vpack.c.b16 %v643, %v643
          %v652 = vpack.c.b16 %v644, %v644
          %v653 = vpack.c.b16 %v645, %v645
          %v654 = vpack.c.b16 %v646, %v646
          %v655 = vpack.c.b16 %v647, %v647
          %664 = vst [vmem:[%s340] sm:$0xf] %v648
          %665 = vst [vmem:[%s340 + $0x4] sm:$0xf] %v649
          %666 = vst [vmem:[%s340 + $0x8] sm:$0xf] %v650
          %667 = vst [vmem:[%s340 + $0xc] sm:$0xf] %v651
          %668 = vst [vmem:[%s340 + $0x10] sm:$0xf] %v652
          %669 = vst [vmem:[%s340 + $0x14] sm:$0xf] %v653
          %670 = vst [vmem:[%s340 + $0x18] sm:$0xf] %v654
          %671 = vst [vmem:[%s340 + $0x1c] sm:$0xf] %v655
          %v672 = vld [vmem:[#allocation8] sm:$0xf]
          %v673 = vld [vmem:[#allocation8 + $0x4] sm:$0xf]
          %v674 = vld [vmem:[#allocation8 + $0x8] sm:$0xf]
          %v675 = vld [vmem:[#allocation8 + $0xc] sm:$0xf]
          %v676 = vld [vmem:[#allocation8 + $0x10] sm:$0xf]
          %v677 = vld [vmem:[#allocation8 + $0x14] sm:$0xf]
          %v678 = vld [vmem:[#allocation8 + $0x18] sm:$0xf]
          %v679 = vld [vmem:[#allocation8 + $0x1c] sm:$0xf]
          %v680 = vld [vmem:[#allocation8 + $0x20] sm:$0xf]
          %v681 = vld [vmem:[#allocation8 + $0x24] sm:$0xf]
          %v682 = vld [vmem:[#allocation8 + $0x28] sm:$0xf]
          %v683 = vld [vmem:[#allocation8 + $0x2c] sm:$0xf]
          %v684 = vld [vmem:[#allocation8 + $0x30] sm:$0xf]
          %v685 = vld [vmem:[#allocation8 + $0x34] sm:$0xf]
          %v686 = vld [vmem:[#allocation8 + $0x38] sm:$0xf]
          %v687 = vld [vmem:[#allocation8 + $0x3c] sm:$0xf]
          %v688 = vld [vmem:[%s4] sm:$0x1]
          %v690 = vlaneseq
          %v691 = vshrl.u32 %v690, 7
          %v692 = vsub.s32 0, %v691
          %v693 = vrot.slane %v688, %v692
          %v711 = vunpack.c.l.b16 %v672
          %v712 = vunpack.c.l.b16 %v673
          %v713 = vunpack.c.l.b16 %v674
          %v714 = vunpack.c.l.b16 %v675
          %v715 = vunpack.c.l.b16 %v676
          %v716 = vunpack.c.l.b16 %v677
          %v717 = vunpack.c.l.b16 %v678
          %v718 = vunpack.c.l.b16 %v679
          %v719 = vunpack.c.l.b16 %v680
          %v720 = vunpack.c.l.b16 %v681
          %v721 = vunpack.c.l.b16 %v682
          %v722 = vunpack.c.l.b16 %v683
          %v723 = vunpack.c.l.b16 %v684
          %v724 = vunpack.c.l.b16 %v685
          %v725 = vunpack.c.l.b16 %v686
          %v726 = vunpack.c.l.b16 %v687
          %v727 = vpack.c.b16 %v712, %v711
          %v728 = vpack.c.b16 %v714, %v713
          %v729 = vpack.c.b16 %v716, %v715
          %v730 = vpack.c.b16 %v718, %v717
          %v731 = vpack.c.b16 %v720, %v719
          %v732 = vpack.c.b16 %v722, %v721
          %v733 = vpack.c.b16 %v724, %v723
          %v734 = vpack.c.b16 %v726, %v725
          %743 = vmatprep.subr.bf16.mxu0 0
          %744 = vmatpush1.bf16.msra.mxu0 %v727
          %745 = vmatprep.subr.bf16.mxu0 0
          %746 = vmatpush1.bf16.msra.mxu0 %v728
          %747 = vmatprep.subr.bf16.mxu0 0
          %748 = vmatpush1.bf16.msra.mxu0 %v729
          %749 = vmatprep.subr.bf16.mxu0 0
          %750 = vmatpush1.bf16.msra.mxu0 %v730
          %751 = vmatprep.subr.bf16.mxu0 0
          %752 = vmatpush1.bf16.msra.mxu0 %v731
          %753 = vmatprep.subr.bf16.mxu0 0
          %754 = vmatpush1.bf16.msra.mxu0 %v732
          %755 = vmatprep.subr.bf16.mxu0 0
          %756 = vmatpush1.bf16.msra.mxu0 %v733
          %757 = vmatprep.subr.bf16.mxu0 0
          %758 = vmatpush1.bf16.msra.mxu0 %v734
          %759 = vmatprep.subr.bf16.mxu0 0
          %760 = vmatpush1.bf16.msra.mxu0 0
          %761 = vmatprep.subr.bf16.mxu0 0
          %762 = vmatpush1.bf16.msra.mxu0 0
          %763 = vmatprep.subr.bf16.mxu0 0
          %764 = vmatpush1.bf16.msra.mxu0 0
          %765 = vmatprep.subr.bf16.mxu0 0
          %766 = vmatpush1.bf16.msra.mxu0 0
          %767 = vmatprep.subr.bf16.mxu0 0
          %768 = vmatpush1.bf16.msra.mxu0 0
          %769 = vmatprep.subr.bf16.mxu0 0
          %770 = vmatpush1.bf16.msra.mxu0 0
          %771 = vmatprep.subr.bf16.mxu0 0
          %772 = vmatpush1.bf16.msra.mxu0 0
          %773 = vmatprep.subr.bf16.mxu0 0
          %774 = vmatpush1.bf16.msra.mxu0 0
          %775 = vmatprep.mubr.bf16.mxu0 0
          %776 = vmatmul.mubr.bf16.gmra.mrb[0].mxu0 %v632
          %v777 = vpop.f32.mrb[0].mxu0
          %v778 = vadd.f32 %v693, %v777
          %v779 = vpop.f32.mrb[0].mxu0
          %v780 = vpop.f32.mrb[0].mxu0
          %v781 = vadd.f32 %v693, %v780
          %v782 = vpop.f32.mrb[0].mxu0
          %783 = vmatprep.mubr.bf16.mxu0 0
          %784 = vmatmul.mubr.bf16.gmra.mrb[0].mxu0 %v633
          %v785 = vpop.f32.mrb[0].mxu0
          %v786 = vadd.f32 %v693, %v785
          %v787 = vpop.f32.mrb[0].mxu0
          %v788 = vpop.f32.mrb[0].mxu0
          %v789 = vadd.f32 %v693, %v788
          %v790 = vpop.f32.mrb[0].mxu0
          %791 = vmatprep.mubr.bf16.mxu0 0
          %792 = vmatmul.mubr.bf16.gmra.mrb[0].mxu0 %v634
          %v793 = vpop.f32.mrb[0].mxu0
          %v794 = vadd.f32 %v693, %v793
          %v795 = vpop.f32.mrb[0].mxu0
          %v796 = vpop.f32.mrb[0].mxu0
          %v797 = vadd.f32 %v693, %v796
          %v798 = vpop.f32.mrb[0].mxu0
          %799 = vmatprep.mubr.bf16.mxu0 0
          %800 = vmatmul.mubr.bf16.gmra.mrb[0].mxu0 %v635
          %v801 = vpop.f32.mrb[0].mxu0
          %v802 = vadd.f32 %v693, %v801
          %v803 = vpop.f32.mrb[0].mxu0
          %v804 = vpop.f32.mrb[0].mxu0
          %v805 = vadd.f32 %v693, %v804
          %v806 = vpop.f32.mrb[0].mxu0
          %807 = vdwg.mxu0
          %v808 = vpack.c.bf16 %v781, %v778
          %v809 = vpack.c.bf16 %v789, %v786
          %v810 = vpack.c.bf16 %v797, %v794
          %v811 = vpack.c.bf16 %v805, %v802
          %v816 = vunpack.c.l.b16 %v808
          %v817 = vunpack.c.h.b16 %v808
          %v818 = vunpack.c.l.b16 %v809
          %v819 = vunpack.c.h.b16 %v809
          %v820 = vunpack.c.l.b16 %v810
          %v821 = vunpack.c.h.b16 %v810
          %v822 = vunpack.c.l.b16 %v811
          %v823 = vunpack.c.h.b16 %v811
          %v824 = vpack.c.b16 %v816, %v816
          %v825 = vpack.c.b16 %v817, %v817
          %v826 = vpack.c.b16 %v818, %v818
          %v827 = vpack.c.b16 %v819, %v819
          %v828 = vpack.c.b16 %v820, %v820
          %v829 = vpack.c.b16 %v821, %v821
          %v830 = vpack.c.b16 %v822, %v822
          %v831 = vpack.c.b16 %v823, %v823
          %840 = vst [vmem:[%s347] sm:$0xf] %v824
          %841 = vst [vmem:[%s347 + $0x4] sm:$0xf] %v825
          %842 = vst [vmem:[%s347 + $0x8] sm:$0xf] %v826
          %843 = vst [vmem:[%s347 + $0xc] sm:$0xf] %v827
          %844 = vst [vmem:[%s347 + $0x10] sm:$0xf] %v828
          %845 = vst [vmem:[%s347 + $0x14] sm:$0xf] %v829
          %846 = vst [vmem:[%s347 + $0x18] sm:$0xf] %v830
          %847 = vst [vmem:[%s347 + $0x1c] sm:$0xf] %v831
        $region60: #{tpu_custom_call.1} parent=39 // pred_fallthru
          _
        %s848 = sand.u32 %s176, 1
        %s849 = scalar_lea.sflag [#allocation5], %s848
        %s850 = sand.u32 %s176, 1
        %s851 = smul.addr %s850, 32
        %s852 = scalar_lea.vmem [#allocation9], %s851
        %s853 = sand.u32 %s204, 1
        %s854 = scalar_lea.sflag [#allocation11], %s853
        %s855 = sand.u32 %s204, 1
        %s856 = smul.addr %s855, 32
        %s857 = scalar_lea.vmem [#allocation10], %s856
        // Predicated region
        $region61: #{tpu_custom_call.1} parent=39 // pred_check
          %p858 = pneg %p186
        $region62: #{tpu_custom_call.1} parent=39 // pred_check_branch
          %860 = sbr.rel (%p858) target = $region64
        $region63: #{tpu_custom_call.1} parent=39 // pred_region
          %s861 = smul.u32 8, %s34
          %s863 = ssub.s32 512, 512
          %864 = vsyncadd %s849, %s863
          %s865 = smul.addr %s33, 8
          %s866 = sadd.s32 %s861, %s865
          %s867 = smul.addr %s866, 64
          %s868 = scalar_lea.hbm %s5, %s867
          %s869 = sshll.u32 %s852, 4
          %s870 = int_to_ptr.vmem [resolvable:$true] %s869
          %875 = dma.vmem_to_hbm [thread:$0]  %s870, 512, %s868, %s849, 64, 64, 4
        $region64: #{tpu_custom_call.1} parent=39 // pred_fallthru
          _
        // Predicated region
        $region65: #{tpu_custom_call.1} parent=39 // pred_check
          %p876 = pneg %p214
        $region66: #{tpu_custom_call.1} parent=39 // pred_check_branch
          %878 = sbr.rel (%p876) target = $region68
        $region67: #{tpu_custom_call.1} parent=39 // pred_region
          %s879 = smul.u32 8, %s34
          %s881 = ssub.s32 512, 512
          %882 = vsyncadd %s854, %s881
          %s883 = smul.addr %s33, 8
          %s884 = sadd.s32 %s879, %s883
          %s885 = smul.addr %s884, 64
          %s886 = scalar_lea.hbm %s6, %s885
          %s887 = sshll.u32 %s857, 4
          %s888 = int_to_ptr.vmem [resolvable:$true] %s887
          %893 = dma.vmem_to_hbm [thread:$0]  %s888, 512, %s886, %s854, 64, 64, 4
        $region68: #{tpu_custom_call.1} parent=39 // pred_fallthru
          _
      $region40: #{tpu_custom_call.1} parent=5 // pred_fallthru
        _
      %p894 = scmp.le.s32.totalorder 2, %s23
      // Predicated region
      $region69: #{tpu_custom_call.1} parent=5 // pred_check
        %p895 = pneg %p894
      $region70: #{tpu_custom_call.1} parent=5 // pred_check_branch
        %897 = sbr.rel (%p895) target = $region72
      $region71: #{tpu_custom_call.1} parent=5 // pred_region
        %s898 = ssub.s32 %s23, 2
        // Predicated region
        $region73: #{tpu_custom_call.1} parent=71 // pred_check
          %p899 = pneg %p192
        $region74: #{tpu_custom_call.1} parent=71 // pred_check_branch
          %901 = sbr.rel (%p899) target = $region76
        $region75: #{tpu_custom_call.1} parent=71 // pred_region
          %s902 = sand.u32 %s177, 1
          %s903 = scalar_lea.sflag [#allocation5], %s902
          %s904 = sand.u32 %s177, 1
          %s905 = smul.addr %s904, 32
          %s906 = scalar_lea.vmem [#allocation9], %s905
          %907 = dma.done %s903, 512
        $region76: #{tpu_custom_call.1} parent=71 // pred_fallthru
          _
        // Predicated region
        $region77: #{tpu_custom_call.1} parent=71 // pred_check
          %p908 = pneg %p220
        $region78: #{tpu_custom_call.1} parent=71 // pred_check_branch
          %910 = sbr.rel (%p908) target = $region80
        $region79: #{tpu_custom_call.1} parent=71 // pred_region
          %s911 = sand.u32 %s205, 1
          %s912 = scalar_lea.sflag [#allocation11], %s911
          %s913 = sand.u32 %s205, 1
          %s914 = smul.addr %s913, 32
          %s915 = scalar_lea.vmem [#allocation10], %s914
          %916 = dma.done %s912, 512
        $region80: #{tpu_custom_call.1} parent=71 // pred_fallthru
          _
      $region72: #{tpu_custom_call.1} parent=5 // pred_fallthru
        _
    $region6: #{tpu_custom_call.1} parent=1 // loop_footer
      %s27 = sadd.s32 1, %s23
    $region7: #{tpu_custom_call.1} parent=1 // loop_footer_branch
      %22 = sbr.rel target = $region3
    $region8: #{tpu_custom_call.1} parent=1 // loop_exit
      _
    %917 = vsyncpa [#allocation4], 1
    %s918 = scalar_lea.sflag [#allocation4], 1
    %919 = vsyncpa %s918, 1
    %920 = vsyncpa [#allocation7], 1
    %921 = vsyncpa [#allocation5], 1
    %s922 = scalar_lea.sflag [#allocation5], 1
    %923 = vsyncpa %s922, 1
    %924 = vsyncpa [#allocation11], 1
    %s925 = scalar_lea.sflag [#allocation11], 1
    %926 = vsyncpa %s925, 1

</llo_original>
